<compile_context>
chip_gen: v6e
topology: v6e:2x2x1
jax: 0.10.0
libtpu: 0.0.40
codegen_flags: <defaults>
</compile_context>

<pallas_src>
import jax
import jax.numpy as jnp
from jax.experimental import pallas as pl
from jax.experimental.pallas import tpu as pltpu


def _basic_block_kernel(x_ref, t1_ref, s1_ref, b1_ref, t2_ref, s2_ref, b2_ref,
                        o_ref, pad_ref):
    """Fused BasicBlock forward for one batch chunk.

    x_ref   : (NB, H, W*C)        bf16  input rows (lane-dense)
    t*_ref  : (3, W*C, W*C)       bf16  block-Toeplitz conv weights (per kh)
    s*_ref  : (1, W*C)            f32   BN scale, tiled over W
    b*_ref  : (1, W*C)            f32   BN bias,  tiled over W
    o_ref   : (NB, H, W*C)        bf16  output rows
    pad_ref : (NB*(H+2), W*C)     bf16  height-halo scratch shared by both convs
    """
    NB, H, WC = x_ref.shape
    HP = H + 2                       # padded rows per image
    M = NB * HP - 2                  # rows fed to each conv matmul (includes
                                     # 2*(NB-1) inter-image rows we discard)

    # Zero the one-row top/bottom borders of every image's halo (4 tiny stores).
    zrow = jnp.zeros((1, WC), pad_ref.dtype)
    for n in range(NB):
        pad_ref[n * HP:n * HP + 1, :] = zrow
        pad_ref[n * HP + H + 1:n * HP + H + 2, :] = zrow

    # Load input once and fill the halo interiors (lane-aligned 128-wide rows).
    x = x_ref[...]                                          # (NB, H, WC) bf16
    for n in range(NB):
        pad_ref[n * HP + 1:n * HP + 1 + H, :] = x[n]

    def conv3x3_bn(t_ref, s_ref, b_ref):
        # 3 lane-dense MXU matmuls (one per kh) against the block-Toeplitz
        # weight; f32 accumulation; f32 per-channel scale+bias epilogue.
        acc = jnp.dot(pad_ref[0:M, :], t_ref[0],
                      preferred_element_type=jnp.float32)
        for kh in (1, 2):
            acc = acc + jnp.dot(pad_ref[kh:kh + M, :], t_ref[kh],
                                preferred_element_type=jnp.float32)
        return acc * s_ref[...] + b_ref[...]                # (M, WC) f32

    # conv1 -> BN1 -> ReLU ; intermediate goes straight back into the scratch.
    h1 = jnp.maximum(conv3x3_bn(t1_ref, s1_ref, b1_ref), 0.0)
    h1 = h1.astype(pad_ref.dtype)
    for n in range(NB):
        pad_ref[n * HP + 1:n * HP + 1 + H, :] = h1[n * HP:n * HP + H]

    # conv2 -> BN2 -> + identity -> ReLU -> bf16 store.
    out = conv3x3_bn(t2_ref, s2_ref, b2_ref)
    for n in range(NB):
        res = out[n * HP:n * HP + H] + x[n].astype(jnp.float32)
        o_ref[n] = jnp.maximum(res, 0.0).astype(o_ref.dtype)


def _make_block_toeplitz(w_hwio, width):
    """(3,3,Cin,Cout) HWIO conv weight -> (3, W*Cin, W*Cout) block-Toeplitz.

    T[kh, w_in*Cin+ci, w_out*Cout+co] = w[kh, w_in-w_out+1, ci, co] when
    |w_in - w_out| <= 1, else 0.  Width padding=1 is encoded by the zero
    blocks, so the kernel needs no width halo and every operand is lane-dense.
    """
    KH, KW, Cin, Cout = w_hwio.shape
    w_in = jnp.arange(width)[:, None]
    w_out = jnp.arange(width)[None, :]
    d = w_in - w_out + 1                                    # (W, W)
    valid = (d >= 0) & (d < KW)
    g = w_hwio[:, jnp.clip(d, 0, KW - 1)]                   # (KH, W, W, Cin, Cout)
    g = jnp.where(valid[None, :, :, None, None], g, jnp.zeros((), g.dtype))
    g = jnp.transpose(g, (0, 1, 3, 2, 4))                   # (KH, Win, Cin, Wout, Cout)
    return g.reshape(KH, width * Cin, width * Cout)


def build_basic_block_forward(eps=1e-5):
    @jax.jit
    def forward(x_nchw, params):
        N, C, H, W = x_nchw.shape
        WC = W * C

        # NCHW (PyTorch) -> lane-dense (N, H, W*C) bf16 rows.
        x = jnp.transpose(x_nchw, (0, 2, 3, 1)).astype(jnp.bfloat16)
        x = x.reshape(N, H, WC)

        def prep(w_oihw, bn):
            w_hwio = jnp.transpose(w_oihw, (2, 3, 1, 0)).astype(jnp.bfloat16)
            t = _make_block_toeplitz(w_hwio, W)                      # bf16
            scale = bn["gamma"] / jnp.sqrt(bn["var"] + eps)          # (C,) f32
            bias = bn["beta"] - bn["mean"] * scale
            return t, jnp.tile(scale, W)[None, :], jnp.tile(bias, W)[None, :]

        t1, s1, b1 = prep(params["w1"], params["bn1"])
        t2, s2, b2 = prep(params["w2"], params["bn2"])

        NB = N                         # whole batch per grid step (toy shapes)
        grid = (N // NB,)

        w_spec = pl.BlockSpec((3, WC, WC), lambda g: (0, 0, 0))
        sb_spec = pl.BlockSpec((1, WC), lambda g: (0, 0))

        out = pl.pallas_call(
            _basic_block_kernel,
            out_shape=jax.ShapeDtypeStruct((N, H, WC), jnp.bfloat16),
            grid=grid,
            in_specs=[
                pl.BlockSpec((NB, H, WC), lambda g: (g, 0, 0)),
                w_spec, sb_spec, sb_spec,
                w_spec, sb_spec, sb_spec,
            ],
            out_specs=pl.BlockSpec((NB, H, WC), lambda g: (g, 0, 0)),
            scratch_shapes=[pltpu.VMEM((NB * (H + 2), WC), jnp.bfloat16)],
            compiler_params=pltpu.CompilerParams(
                dimension_semantics=("parallel",)),
        )(x, t1, s1, b1, t2, s2, b2)

        out = out.reshape(N, H, W, C)
        return jnp.transpose(out, (0, 3, 1, 2))              # NCHW, bf16
    return forward


def init_basic_block_params(key, planes):
    """PyTorch-style params: OIHW conv weights (f32) + BatchNorm running stats."""
    ks = jax.random.split(key, 4)

    def make_bn(k):
        kk = jax.random.split(k, 4)
        return dict(
            gamma=1.0 + 0.1 * jax.random.normal(kk[0], (planes,), jnp.float32),
            beta=0.1 * jax.random.normal(kk[1], (planes,), jnp.float32),
            mean=0.05 * jax.random.normal(kk[2], (planes,), jnp.float32),
            var=1.0 + 0.1 * jax.random.uniform(kk[3], (planes,), jnp.float32))

    return dict(
        w1=0.1 * jax.random.normal(ks[0], (planes, planes, 3, 3), jnp.float32),
        bn1=make_bn(ks[2]),
        w2=0.1 * jax.random.normal(ks[1], (planes, planes, 3, 3), jnp.float32),
        bn2=make_bn(ks[3]))


def reference_forward(x_nchw, params, eps=1e-5):
    """Plain-JAX (lax.conv) reference with the same bf16/f32 precision policy."""
    x = jnp.transpose(x_nchw, (0, 2, 3, 1)).astype(jnp.bfloat16)
    dn = ("NHWC", "HWIO", "NHWC")

    def conv(v, w_oihw):
        w = jnp.transpose(w_oihw, (2, 3, 1, 0)).astype(jnp.bfloat16)
        return jax.lax.conv_general_dilated(
            v, w, window_strides=(1, 1), padding=((1, 1), (1, 1)),
            dimension_numbers=dn, preferred_element_type=jnp.float32)

    def bn(v, p):
        s = p["gamma"] / jnp.sqrt(p["var"] + eps)
        return v * s + (p["beta"] - p["mean"] * s)

    h = jnp.maximum(bn(conv(x, params["w1"]), params["bn1"]), 0.0)
    out = bn(conv(h.astype(jnp.bfloat16), params["w2"]), params["bn2"])
    out = jnp.maximum(out + x.astype(jnp.float32), 0.0)
    return jnp.transpose(out, (0, 3, 1, 2))


if __name__ == "__main__":
    key = jax.random.PRNGKey(0)
    k_x, k_p = jax.random.split(key)

    N, C, H, W = 2, 8, 16, 16          # inplanes = planes = 8, stride = 1, W*C = 128
    x = jax.random.normal(k_x, (N, C, H, W), jnp.float32)
    params = init_basic_block_params(k_p, C)

    forward = build_basic_block_forward()
    out = jax.block_until_ready(forward(x, params))

    ref = reference_forward(x, params)
    assert out.shape == (N, C, H, W)
    assert jnp.allclose(out.astype(jnp.float32), ref, atol=2e-2, rtol=2e-2), \
        "mismatch vs reference"

    print("KERNEL_OK")
</pallas_src>

<mosaic_0001>
module attributes {stable_mosaic.version = 11 : i64} {
  func.func @_basic_block_kernel(%arg0: i32, %arg1: memref<2x16x128xbf16, #tpu.memory_space<vmem>>, %arg2: memref<3x128x128xbf16, #tpu.memory_space<vmem>>, %arg3: memref<1x128xf32, #tpu.memory_space<vmem>>, %arg4: memref<1x128xf32, #tpu.memory_space<vmem>>, %arg5: memref<3x128x128xbf16, #tpu.memory_space<vmem>>, %arg6: memref<1x128xf32, #tpu.memory_space<vmem>>, %arg7: memref<1x128xf32, #tpu.memory_space<vmem>>, %arg8: memref<2x16x128xbf16, #tpu.memory_space<vmem>>, %arg9: memref<36x128xbf16, #tpu.memory_space<vmem>>) attributes {dimension_semantics = [#tpu.dimension_semantics<parallel>], iteration_bounds = array<i64: 1>, scalar_prefetch = 0 : i64, scratch_operands = 1 : i64, tpu.core_type = #tpu.core_type<tc>, window_params = [{transform_indices = @transform_0, window_bounds = array<i64: 2, 16, 128>}, {pipeline_mode = #tpu.pipeline_mode<synchronous>, transform_indices = @transform_1, window_bounds = array<i64: 3, 128, 128>}, {pipeline_mode = #tpu.pipeline_mode<synchronous>, transform_indices = @transform_2, window_bounds = array<i64: 1, 128>}, {pipeline_mode = #tpu.pipeline_mode<synchronous>, transform_indices = @transform_3, window_bounds = array<i64: 1, 128>}, {pipeline_mode = #tpu.pipeline_mode<synchronous>, transform_indices = @transform_4, window_bounds = array<i64: 3, 128, 128>}, {pipeline_mode = #tpu.pipeline_mode<synchronous>, transform_indices = @transform_5, window_bounds = array<i64: 1, 128>}, {pipeline_mode = #tpu.pipeline_mode<synchronous>, transform_indices = @transform_6, window_bounds = array<i64: 1, 128>}, {transform_indices = @transform_7, window_bounds = array<i64: 2, 16, 128>}]} {
    %cst = arith.constant 0.000000e+00 : bf16
    %0 = vector.broadcast %cst : bf16 to vector<1x128xbf16>
    %c0 = arith.constant 0 : index
    %c0_0 = arith.constant 0 : index
    %1 = vector.load %arg9[%c0, %c0_0] : memref<36x128xbf16, #tpu.memory_space<vmem>>, vector<1x128xbf16>
    tpu.vector_store %arg9[%c0, %c0_0], %0 {strides = array<i32>} : memref<36x128xbf16, #tpu.memory_space<vmem>>, vector<1x128xbf16>,
    %c17 = arith.constant 17 : index
    %c0_1 = arith.constant 0 : index
    %2 = vector.load %arg9[%c17, %c0_1] : memref<36x128xbf16, #tpu.memory_space<vmem>>, vector<1x128xbf16>
    tpu.vector_store %arg9[%c17, %c0_1], %0 {strides = array<i32>} : memref<36x128xbf16, #tpu.memory_space<vmem>>, vector<1x128xbf16>,
    %c18 = arith.constant 18 : index
    %c0_2 = arith.constant 0 : index
    %3 = vector.load %arg9[%c18, %c0_2] : memref<36x128xbf16, #tpu.memory_space<vmem>>, vector<1x128xbf16>
    tpu.vector_store %arg9[%c18, %c0_2], %0 {strides = array<i32>} : memref<36x128xbf16, #tpu.memory_space<vmem>>, vector<1x128xbf16>,
    %c35 = arith.constant 35 : index
    %c0_3 = arith.constant 0 : index
    %4 = vector.load %arg9[%c35, %c0_3] : memref<36x128xbf16, #tpu.memory_space<vmem>>, vector<1x128xbf16>
    tpu.vector_store %arg9[%c35, %c0_3], %0 {strides = array<i32>} : memref<36x128xbf16, #tpu.memory_space<vmem>>, vector<1x128xbf16>,
    %c0_4 = arith.constant 0 : index
    %c0_5 = arith.constant 0 : index
    %c0_6 = arith.constant 0 : index
    %5 = vector.load %arg1[%c0_4, %c0_5, %c0_6] : memref<2x16x128xbf16, #tpu.memory_space<vmem>>, vector<2x16x128xbf16>
    %6 = vector.extract_strided_slice %5 {offsets = [0, 0, 0], sizes = [1, 16, 128], strides = [1, 1, 1]} : vector<2x16x128xbf16> to vector<1x16x128xbf16>
    %7 = vector.shape_cast %6 : vector<1x16x128xbf16> to vector<16x128xbf16>
    %c1 = arith.constant 1 : index
    %c0_7 = arith.constant 0 : index
    %8 = vector.load %arg9[%c1, %c0_7] : memref<36x128xbf16, #tpu.memory_space<vmem>>, vector<16x128xbf16>
    tpu.vector_store %arg9[%c1, %c0_7], %7 {strides = array<i32>} : memref<36x128xbf16, #tpu.memory_space<vmem>>, vector<16x128xbf16>,
    %9 = vector.extract_strided_slice %5 {offsets = [1, 0, 0], sizes = [1, 16, 128], strides = [1, 1, 1]} : vector<2x16x128xbf16> to vector<1x16x128xbf16>
    %10 = vector.shape_cast %9 : vector<1x16x128xbf16> to vector<16x128xbf16>
    %c19 = arith.constant 19 : index
    %c0_8 = arith.constant 0 : index
    %11 = vector.load %arg9[%c19, %c0_8] : memref<36x128xbf16, #tpu.memory_space<vmem>>, vector<16x128xbf16>
    tpu.vector_store %arg9[%c19, %c0_8], %10 {strides = array<i32>} : memref<36x128xbf16, #tpu.memory_space<vmem>>, vector<16x128xbf16>,
    %c0_9 = arith.constant 0 : index
    %c0_10 = arith.constant 0 : index
    %12 = vector.load %arg9[%c0_9, %c0_10] : memref<36x128xbf16, #tpu.memory_space<vmem>>, vector<34x128xbf16>
    %c0_11 = arith.constant 0 : index
    %c0_12 = arith.constant 0 : index
    %c0_13 = arith.constant 0 : index
    %13 = vector.load %arg2[%c0_11, %c0_12, %c0_13] : memref<3x128x128xbf16, #tpu.memory_space<vmem>>, vector<1x128x128xbf16>
    %14 = vector.shape_cast %13 : vector<1x128x128xbf16> to vector<128x128xbf16>
    %cst_14 = arith.constant dense<0.000000e+00> : vector<34x128xf32>
    %15 = tpu.matmul %12, %14, %cst_14 {dimension_numbers = #tpu.dot_dimension_numbers<[1], [0], [0], [1], [0, 0, 1, 1], [], []>} : vector<34x128xbf16>, vector<128x128xbf16>, vector<34x128xf32> -> vector<34x128xf32>
    %c1_15 = arith.constant 1 : index
    %c0_16 = arith.constant 0 : index
    %16 = vector.load %arg9[%c1_15, %c0_16] : memref<36x128xbf16, #tpu.memory_space<vmem>>, vector<34x128xbf16>
    %c1_17 = arith.constant 1 : index
    %c0_18 = arith.constant 0 : index
    %c0_19 = arith.constant 0 : index
    %17 = vector.load %arg2[%c1_17, %c0_18, %c0_19] : memref<3x128x128xbf16, #tpu.memory_space<vmem>>, vector<1x128x128xbf16>
    %18 = vector.shape_cast %17 : vector<1x128x128xbf16> to vector<128x128xbf16>
    %cst_20 = arith.constant dense<0.000000e+00> : vector<34x128xf32>
    %19 = tpu.matmul %16, %18, %cst_20 {dimension_numbers = #tpu.dot_dimension_numbers<[1], [0], [0], [1], [0, 0, 1, 1], [], []>} : vector<34x128xbf16>, vector<128x128xbf16>, vector<34x128xf32> -> vector<34x128xf32>
    %20 = arith.addf %15, %19 : vector<34x128xf32>
    %c2 = arith.constant 2 : index
    %c0_21 = arith.constant 0 : index
    %21 = vector.load %arg9[%c2, %c0_21] : memref<36x128xbf16, #tpu.memory_space<vmem>>, vector<34x128xbf16>
    %c2_22 = arith.constant 2 : index
    %c0_23 = arith.constant 0 : index
    %c0_24 = arith.constant 0 : index
    %22 = vector.load %arg2[%c2_22, %c0_23, %c0_24] : memref<3x128x128xbf16, #tpu.memory_space<vmem>>, vector<1x128x128xbf16>
    %23 = vector.shape_cast %22 : vector<1x128x128xbf16> to vector<128x128xbf16>
    %cst_25 = arith.constant dense<0.000000e+00> : vector<34x128xf32>
    %24 = tpu.matmul %21, %23, %cst_25 {dimension_numbers = #tpu.dot_dimension_numbers<[1], [0], [0], [1], [0, 0, 1, 1], [], []>} : vector<34x128xbf16>, vector<128x128xbf16>, vector<34x128xf32> -> vector<34x128xf32>
    %25 = arith.addf %20, %24 : vector<34x128xf32>
    %c0_26 = arith.constant 0 : index
    %c0_27 = arith.constant 0 : index
    %26 = vector.load %arg3[%c0_26, %c0_27] : memref<1x128xf32, #tpu.memory_space<vmem>>, vector<1x128xf32>
    %27 = vector.broadcast %26 : vector<1x128xf32> to vector<34x128xf32>
    %28 = arith.mulf %25, %27 : vector<34x128xf32>
    %c0_28 = arith.constant 0 : index
    %c0_29 = arith.constant 0 : index
    %29 = vector.load %arg4[%c0_28, %c0_29] : memref<1x128xf32, #tpu.memory_space<vmem>>, vector<1x128xf32>
    %30 = vector.broadcast %29 : vector<1x128xf32> to vector<34x128xf32>
    %31 = arith.addf %28, %30 : vector<34x128xf32>
    %cst_30 = arith.constant 0.000000e+00 : f32
    %32 = vector.broadcast %cst_30 : f32 to vector<34x128xf32>
    %33 = arith.maximumf %31, %32 : vector<34x128xf32>
    %34 = arith.truncf %33 : vector<34x128xf32> to vector<34x128xbf16>
    %35 = vector.extract_strided_slice %34 {offsets = [0, 0], sizes = [16, 128], strides = [1, 1]} : vector<34x128xbf16> to vector<16x128xbf16>
    %c1_31 = arith.constant 1 : index
    %c0_32 = arith.constant 0 : index
    %36 = vector.load %arg9[%c1_31, %c0_32] : memref<36x128xbf16, #tpu.memory_space<vmem>>, vector<16x128xbf16>
    tpu.vector_store %arg9[%c1_31, %c0_32], %35 {strides = array<i32>} : memref<36x128xbf16, #tpu.memory_space<vmem>>, vector<16x128xbf16>,
    %37 = vector.extract_strided_slice %34 {offsets = [18, 0], sizes = [16, 128], strides = [1, 1]} : vector<34x128xbf16> to vector<16x128xbf16>
    %c19_33 = arith.constant 19 : index
    %c0_34 = arith.constant 0 : index
    %38 = vector.load %arg9[%c19_33, %c0_34] : memref<36x128xbf16, #tpu.memory_space<vmem>>, vector<16x128xbf16>
    tpu.vector_store %arg9[%c19_33, %c0_34], %37 {strides = array<i32>} : memref<36x128xbf16, #tpu.memory_space<vmem>>, vector<16x128xbf16>,
    %c0_35 = arith.constant 0 : index
    %c0_36 = arith.constant 0 : index
    %39 = vector.load %arg9[%c0_35, %c0_36] : memref<36x128xbf16, #tpu.memory_space<vmem>>, vector<34x128xbf16>
    %c0_37 = arith.constant 0 : index
    %c0_38 = arith.constant 0 : index
    %c0_39 = arith.constant 0 : index
    %40 = vector.load %arg5[%c0_37, %c0_38, %c0_39] : memref<3x128x128xbf16, #tpu.memory_space<vmem>>, vector<1x128x128xbf16>
    %41 = vector.shape_cast %40 : vector<1x128x128xbf16> to vector<128x128xbf16>
    %cst_40 = arith.constant dense<0.000000e+00> : vector<34x128xf32>
    %42 = tpu.matmul %39, %41, %cst_40 {dimension_numbers = #tpu.dot_dimension_numbers<[1], [0], [0], [1], [0, 0, 1, 1], [], []>} : vector<34x128xbf16>, vector<128x128xbf16>, vector<34x128xf32> -> vector<34x128xf32>
    %c1_41 = arith.constant 1 : index
    %c0_42 = arith.constant 0 : index
    %43 = vector.load %arg9[%c1_41, %c0_42] : memref<36x128xbf16, #tpu.memory_space<vmem>>, vector<34x128xbf16>
    %c1_43 = arith.constant 1 : index
    %c0_44 = arith.constant 0 : index
    %c0_45 = arith.constant 0 : index
    %44 = vector.load %arg5[%c1_43, %c0_44, %c0_45] : memref<3x128x128xbf16, #tpu.memory_space<vmem>>, vector<1x128x128xbf16>
    %45 = vector.shape_cast %44 : vector<1x128x128xbf16> to vector<128x128xbf16>
    %cst_46 = arith.constant dense<0.000000e+00> : vector<34x128xf32>
    %46 = tpu.matmul %43, %45, %cst_46 {dimension_numbers = #tpu.dot_dimension_numbers<[1], [0], [0], [1], [0, 0, 1, 1], [], []>} : vector<34x128xbf16>, vector<128x128xbf16>, vector<34x128xf32> -> vector<34x128xf32>
    %47 = arith.addf %42, %46 : vector<34x128xf32>
    %c2_47 = arith.constant 2 : index
    %c0_48 = arith.constant 0 : index
    %48 = vector.load %arg9[%c2_47, %c0_48] : memref<36x128xbf16, #tpu.memory_space<vmem>>, vector<34x128xbf16>
    %c2_49 = arith.constant 2 : index
    %c0_50 = arith.constant 0 : index
    %c0_51 = arith.constant 0 : index
    %49 = vector.load %arg5[%c2_49, %c0_50, %c0_51] : memref<3x128x128xbf16, #tpu.memory_space<vmem>>, vector<1x128x128xbf16>
    %50 = vector.shape_cast %49 : vector<1x128x128xbf16> to vector<128x128xbf16>
    %cst_52 = arith.constant dense<0.000000e+00> : vector<34x128xf32>
    %51 = tpu.matmul %48, %50, %cst_52 {dimension_numbers = #tpu.dot_dimension_numbers<[1], [0], [0], [1], [0, 0, 1, 1], [], []>} : vector<34x128xbf16>, vector<128x128xbf16>, vector<34x128xf32> -> vector<34x128xf32>
    %52 = arith.addf %47, %51 : vector<34x128xf32>
    %c0_53 = arith.constant 0 : index
    %c0_54 = arith.constant 0 : index
    %53 = vector.load %arg6[%c0_53, %c0_54] : memref<1x128xf32, #tpu.memory_space<vmem>>, vector<1x128xf32>
    %54 = vector.broadcast %53 : vector<1x128xf32> to vector<34x128xf32>
    %55 = arith.mulf %52, %54 : vector<34x128xf32>
    %c0_55 = arith.constant 0 : index
    %c0_56 = arith.constant 0 : index
    %56 = vector.load %arg7[%c0_55, %c0_56] : memref<1x128xf32, #tpu.memory_space<vmem>>, vector<1x128xf32>
    %57 = vector.broadcast %56 : vector<1x128xf32> to vector<34x128xf32>
    %58 = arith.addf %55, %57 : vector<34x128xf32>
    %59 = vector.extract_strided_slice %58 {offsets = [0, 0], sizes = [16, 128], strides = [1, 1]} : vector<34x128xf32> to vector<16x128xf32>
    %60 = vector.extract_strided_slice %5 {offsets = [0, 0, 0], sizes = [1, 16, 128], strides = [1, 1, 1]} : vector<2x16x128xbf16> to vector<1x16x128xbf16>
    %61 = vector.shape_cast %60 : vector<1x16x128xbf16> to vector<16x128xbf16>
    %62 = arith.extf %61 : vector<16x128xbf16> to vector<16x128xf32>
    %63 = arith.addf %59, %62 : vector<16x128xf32>
    %cst_57 = arith.constant 0.000000e+00 : f32
    %64 = vector.broadcast %cst_57 : f32 to vector<16x128xf32>
    %65 = arith.maximumf %63, %64 : vector<16x128xf32>
    %66 = arith.truncf %65 : vector<16x128xf32> to vector<16x128xbf16>
    %c0_58 = arith.constant 0 : index
    %c0_59 = arith.constant 0 : index
    %c0_60 = arith.constant 0 : index
    %67 = vector.load %arg8[%c0_58, %c0_59, %c0_60] : memref<2x16x128xbf16, #tpu.memory_space<vmem>>, vector<1x16x128xbf16>
    %68 = vector.shape_cast %67 : vector<1x16x128xbf16> to vector<16x128xbf16>
    %69 = vector.shape_cast %66 : vector<16x128xbf16> to vector<1x16x128xbf16>
    tpu.vector_store %arg8[%c0_58, %c0_59, %c0_60], %69 {strides = array<i32>} : memref<2x16x128xbf16, #tpu.memory_space<vmem>>, vector<1x16x128xbf16>,
    %70 = vector.extract_strided_slice %58 {offsets = [18, 0], sizes = [16, 128], strides = [1, 1]} : vector<34x128xf32> to vector<16x128xf32>
    %71 = vector.extract_strided_slice %5 {offsets = [1, 0, 0], sizes = [1, 16, 128], strides = [1, 1, 1]} : vector<2x16x128xbf16> to vector<1x16x128xbf16>
    %72 = vector.shape_cast %71 : vector<1x16x128xbf16> to vector<16x128xbf16>
    %73 = arith.extf %72 : vector<16x128xbf16> to vector<16x128xf32>
    %74 = arith.addf %70, %73 : vector<16x128xf32>
    %cst_61 = arith.constant 0.000000e+00 : f32
    %75 = vector.broadcast %cst_61 : f32 to vector<16x128xf32>
    %76 = arith.maximumf %74, %75 : vector<16x128xf32>
    %77 = arith.truncf %76 : vector<16x128xf32> to vector<16x128xbf16>
    %c1_62 = arith.constant 1 : index
    %c0_63 = arith.constant 0 : index
    %c0_64 = arith.constant 0 : index
    %78 = vector.load %arg8[%c1_62, %c0_63, %c0_64] : memref<2x16x128xbf16, #tpu.memory_space<vmem>>, vector<1x16x128xbf16>
    %79 = vector.shape_cast %78 : vector<1x16x128xbf16> to vector<16x128xbf16>
    %80 = vector.shape_cast %77 : vector<16x128xbf16> to vector<1x16x128xbf16>
    tpu.vector_store %arg8[%c1_62, %c0_63, %c0_64], %80 {strides = array<i32>} : memref<2x16x128xbf16, #tpu.memory_space<vmem>>, vector<1x16x128xbf16>,
    return
  }
  func.func @transform_0(%arg0: i32) -> (i32, i32, i32) {
    %c0_i32 = arith.constant 0 : i32
    %c0_i32_0 = arith.constant 0 : i32
    %c0_i32_1 = arith.constant 0 : i32
    return %arg0, %c0_i32, %c0_i32_0 : i32, i32, i32
  }
  func.func @transform_1(%arg0: i32) -> (i32, i32, i32) {
    %c0_i32 = arith.constant 0 : i32
    %c0_i32_0 = arith.constant 0 : i32
    %c0_i32_1 = arith.constant 0 : i32
    %c0_i32_2 = arith.constant 0 : i32
    return %c0_i32, %c0_i32_0, %c0_i32_1 : i32, i32, i32
  }
  func.func @transform_2(%arg0: i32) -> (i32, i32) {
    %c0_i32 = arith.constant 0 : i32
    %c0_i32_0 = arith.constant 0 : i32
    %c0_i32_1 = arith.constant 0 : i32
    return %c0_i32, %c0_i32_0 : i32, i32
  }
  func.func @transform_3(%arg0: i32) -> (i32, i32) {
    %c0_i32 = arith.constant 0 : i32
    %c0_i32_0 = arith.constant 0 : i32
    %c0_i32_1 = arith.constant 0 : i32
    return %c0_i32, %c0_i32_0 : i32, i32
  }
  func.func @transform_4(%arg0: i32) -> (i32, i32, i32) {
    %c0_i32 = arith.constant 0 : i32
    %c0_i32_0 = arith.constant 0 : i32
    %c0_i32_1 = arith.constant 0 : i32
    %c0_i32_2 = arith.constant 0 : i32
    return %c0_i32, %c0_i32_0, %c0_i32_1 : i32, i32, i32
  }
  func.func @transform_5(%arg0: i32) -> (i32, i32) {
    %c0_i32 = arith.constant 0 : i32
    %c0_i32_0 = arith.constant 0 : i32
    %c0_i32_1 = arith.constant 0 : i32
    return %c0_i32, %c0_i32_0 : i32, i32
  }
  func.func @transform_6(%arg0: i32) -> (i32, i32) {
    %c0_i32 = arith.constant 0 : i32
    %c0_i32_0 = arith.constant 0 : i32
    %c0_i32_1 = arith.constant 0 : i32
    return %c0_i32, %c0_i32_0 : i32, i32
  }
  func.func @transform_7(%arg0: i32) -> (i32, i32, i32) {
    %c0_i32 = arith.constant 0 : i32
    %c0_i32_0 = arith.constant 0 : i32
    %c0_i32_1 = arith.constant 0 : i32
    return %arg0, %c0_i32, %c0_i32_0 : i32, i32, i32
  }
}

</mosaic_0001>

<llo_original>
// kernel: tile.23
$region0: #{tile.23}
  #allocation0 [shape = 's32[1]{0}', space=sflag, size = 0x4, scoped, tag = 'scoped memory for tile.23']
  %s0 = inlined_call_operand.vmem [shape: f32[8], index: 0, kind: input, shape index: {}]
  %s1 = inlined_call_operand.vmem [shape: f32[16,8], index: 1, kind: output, shape index: {}]
  // Predicated region
  $region2: #{tile.23} parent=0 // pred_check
    _
  $region3: #{tile.23} parent=0 // pred_check_branch
    %3 = sbr.rel (0) target = $region5
  $region4: #{tile.23} parent=0 // pred_region
    _
  $region5: #{tile.23} parent=0 // pred_fallthru
    _
  %v4 = vld [vmem:[%s0] ss:$0 sm:$0xff]
  %5 = vst [vmem:[%s1] sm:$0xff] %v4
  %s6 = scalar_lea.vmem %s1, 8
  %7 = vst [vmem:[%s6] sm:$0xff] %v4

// kernel: tile.24
$region0: #{tile.24}
  %s0 = inlined_call_operand.vmem [shape: f32[16,8], index: 0, kind: input, shape index: {}]
  %s1 = inlined_call_operand.vmem [shape: f32[1,128], index: 1, kind: output, shape index: {}]
  $region1: #{tile.24} parent=0
    #allocation0 [shape = 'u8[4096]{0}', space=vmem, size = 0x1000, scoped, tag = 'scoped mem for output reshape']
    %v2 = vld [vmem:[%s0] sm:$0x1]
    %vm3 = vcmask 64512
    %4 = vst.msk [vmem:[#allocation0] sm:$0x1] %vm3, %v2
    %s5 = scalar_lea.vmem %s0, 15
    %v6 = vld [vmem:[%s5] sm:$0x1]
    %7 = vrot.lane.b32.xlu0 %v6, 120
    %v8 = vpop.permute.xlu0 %7
    %vm9 = vcmask 1048512
    %10 = vst.msk [vmem:[#allocation0] sm:$0x1] %vm9, %v8
    %s11 = scalar_lea.vmem %s0, 14
    %v12 = vld [vmem:[%s11] sm:$0x1]
    %13 = vrot.lane.b32.xlu0 %v12, 112
    %v14 = vpop.permute.xlu0 %13
    %vm15 = vcmask 982912
    %16 = vst.msk [vmem:[#allocation0] sm:$0x1] %vm15, %v14
    %s17 = scalar_lea.vmem %s0, 13
    %v18 = vld [vmem:[%s17] sm:$0x1]
    %19 = vrot.lane.b32.xlu0 %v18, 104
    %v20 = vpop.permute.xlu0 %19
    %vm21 = vcmask 917312
    %22 = vst.msk [vmem:[#allocation0] sm:$0x1] %vm21, %v20
    %s23 = scalar_lea.vmem %s0, 12
    %v24 = vld [vmem:[%s23] sm:$0x1]
    %25 = vrot.lane.b32.xlu0 %v24, 96
    %v26 = vpop.permute.xlu0 %25
    %vm27 = vcmask 851712
    %28 = vst.msk [vmem:[#allocation0] sm:$0x1] %vm27, %v26
    %s29 = scalar_lea.vmem %s0, 11
    %v30 = vld [vmem:[%s29] sm:$0x1]
    %31 = vrot.lane.b32.xlu0 %v30, 88
    %v32 = vpop.permute.xlu0 %31
    %vm33 = vcmask 786112
    %34 = vst.msk [vmem:[#allocation0] sm:$0x1] %vm33, %v32
    %s35 = scalar_lea.vmem %s0, 10
    %v36 = vld [vmem:[%s35] sm:$0x1]
    %37 = vrot.lane.b32.xlu0 %v36, 80
    %v38 = vpop.permute.xlu0 %37
    %vm39 = vcmask 720512
    %40 = vst.msk [vmem:[#allocation0] sm:$0x1] %vm39, %v38
    %s41 = scalar_lea.vmem %s0, 9
    %v42 = vld [vmem:[%s41] sm:$0x1]
    %43 = vrot.lane.b32.xlu0 %v42, 72
    %v44 = vpop.permute.xlu0 %43
    %vm45 = vcmask 654912
    %46 = vst.msk [vmem:[#allocation0] sm:$0x1] %vm45, %v44
    %s47 = scalar_lea.vmem %s0, 8
    %v48 = vld [vmem:[%s47] sm:$0x1]
    %49 = vrot.lane.b32.xlu0 %v48, 64
    %v50 = vpop.permute.xlu0 %49
    %vm51 = vcmask 589312
    %52 = vst.msk [vmem:[#allocation0] sm:$0x1] %vm51, %v50
    %s53 = scalar_lea.vmem %s0, 7
    %v54 = vld [vmem:[%s53] sm:$0x1]
    %55 = vrot.lane.b32.xlu0 %v54, 56
    %v56 = vpop.permute.xlu0 %55
    %vm57 = vcmask 523712
    %58 = vst.msk [vmem:[#allocation0] sm:$0x1] %vm57, %v56
    %s59 = scalar_lea.vmem %s0, 6
    %v60 = vld [vmem:[%s59] sm:$0x1]
    %61 = vrot.lane.b32.xlu0 %v60, 48
    %v62 = vpop.permute.xlu0 %61
    %vm63 = vcmask 458112
    %64 = vst.msk [vmem:[#allocation0] sm:$0x1] %vm63, %v62
    %s65 = scalar_lea.vmem %s0, 5
    %v66 = vld [vmem:[%s65] sm:$0x1]
    %67 = vrot.lane.b32.xlu0 %v66, 40
    %v68 = vpop.permute.xlu0 %67
    %vm69 = vcmask 392512
    %70 = vst.msk [vmem:[#allocation0] sm:$0x1] %vm69, %v68
    %s71 = scalar_lea.vmem %s0, 4
    %v72 = vld [vmem:[%s71] sm:$0x1]
    %73 = vrot.lane.b32.xlu0 %v72, 32
    %v74 = vpop.permute.xlu0 %73
    %vm75 = vcmask 326912
    %76 = vst.msk [vmem:[#allocation0] sm:$0x1] %vm75, %v74
    %s77 = scalar_lea.vmem %s0, 3
    %v78 = vld [vmem:[%s77] sm:$0x1]
    %79 = vrot.lane.b32.xlu0 %v78, 24
    %v80 = vpop.permute.xlu0 %79
    %vm81 = vcmask 261312
    %82 = vst.msk [vmem:[#allocation0] sm:$0x1] %vm81, %v80
    %s83 = scalar_lea.vmem %s0, 2
    %v84 = vld [vmem:[%s83] sm:$0x1]
    %85 = vrot.lane.b32.xlu0 %v84, 16
    %v86 = vpop.permute.xlu0 %85
    %vm87 = vcmask 195712
    %88 = vst.msk [vmem:[#allocation0] sm:$0x1] %vm87, %v86
    %s89 = scalar_lea.vmem %s0, 1
    %v90 = vld [vmem:[%s89] sm:$0x1]
    %91 = vrot.lane.b32.xlu0 %v90, 8
    %v92 = vpop.permute.xlu0 %91
    %vm93 = vcmask 130112
    %94 = vst.msk [vmem:[#allocation0] sm:$0x1] %vm93, %v92
    %s96 = sshll.u32 1, 1
    %s97 = ssub.s32 %s96, 1
    %v99 = vld [vmem:[#allocation0] sm:%s97]
    %s100 = sshll.u32 1, 1
    %s101 = ssub.s32 %s100, 1
    %102 = vst [vmem:[%s1] sm:%s101] %v99

// kernel: forward.1
$region0: #{forward.1}
  #allocation0 [shape = 'u32[]', space=smem, size = 0x4, offset = 0x4, fixed_abs, tag = 'smem constant byte address 0x4 - core index']
  #allocation1 [shape = 'u32[144,128]{1,0:T(1,128)}', space=vmem, size = 0x12000, scoped, tag = 'internal scratch']
  #allocation2 [shape = 'bf16[36,128]{1,0:T(8,128)(2,1)}', space=vmem, size = 0x2800, scoped, tag = 'scratch operand']
  %s0 = inlined_call_operand.vmem [shape: bf16[2,16,128], index: 0, kind: input, shape index: {}]
  %s1 = inlined_call_operand.vmem [shape: bf16[3,128,128], index: 1, kind: input, shape index: {}]
  %s2 = inlined_call_operand.vmem [shape: f32[1,128], index: 2, kind: input, shape index: {}]
  %s3 = inlined_call_operand.vmem [shape: f32[1,128], index: 3, kind: input, shape index: {}]
  %s4 = inlined_call_operand.vmem [shape: bf16[3,128,128], index: 4, kind: input, shape index: {}]
  %s5 = inlined_call_operand.vmem [shape: f32[1,128], index: 5, kind: input, shape index: {}]
  %s6 = inlined_call_operand.vmem [shape: f32[1,128], index: 6, kind: input, shape index: {}]
  %s7 = inlined_call_operand.vmem [shape: bf16[2,16,128], index: 7, kind: output, shape index: {}]
  %s8 = sld [smem:[#allocation0]]
  $region38: #{forward.1} parent=0
    _
  %s10 = ssub.s32 1, %s8
  %s11 = scalar_select 0, %s10, %s8
  // Predicated region
  $region2: #{forward.1} parent=0 // pred_check
    _
  $region3: #{forward.1} parent=0 // pred_check_branch
    %13 = sbr.rel (0) target = $region5
  $region4: #{forward.1} parent=0 // pred_region
    _
  $region5: #{forward.1} parent=0 // pred_fallthru
    _
  // Predicated region
  $region6: #{forward.1} parent=0 // pred_check
    _
  $region7: #{forward.1} parent=0 // pred_check_branch
    %15 = sbr.rel (0) target = $region9
  $region8: #{forward.1} parent=0 // pred_region
    _
  $region9: #{forward.1} parent=0 // pred_fallthru
    _
  // Predicated region
  $region10: #{forward.1} parent=0 // pred_check
    _
  $region11: #{forward.1} parent=0 // pred_check_branch
    %17 = sbr.rel (0) target = $region13
  $region12: #{forward.1} parent=0 // pred_region
    _
  $region13: #{forward.1} parent=0 // pred_fallthru
    _
  // Predicated region
  $region14: #{forward.1} parent=0 // pred_check
    _
  $region15: #{forward.1} parent=0 // pred_check_branch
    %19 = sbr.rel (0) target = $region17
  $region16: #{forward.1} parent=0 // pred_region
    _
  $region17: #{forward.1} parent=0 // pred_fallthru
    _
  // Predicated region
  $region18: #{forward.1} parent=0 // pred_check
    _
  $region19: #{forward.1} parent=0 // pred_check_branch
    %21 = sbr.rel (0) target = $region21
  $region20: #{forward.1} parent=0 // pred_region
    _
  $region21: #{forward.1} parent=0 // pred_fallthru
    _
  // Predicated region
  $region22: #{forward.1} parent=0 // pred_check
    _
  $region23: #{forward.1} parent=0 // pred_check_branch
    %23 = sbr.rel (0) target = $region25
  $region24: #{forward.1} parent=0 // pred_region
    _
  $region25: #{forward.1} parent=0 // pred_fallthru
    _
  // Predicated region
  $region26: #{forward.1} parent=0 // pred_check
    _
  $region27: #{forward.1} parent=0 // pred_check_branch
    %25 = sbr.rel (0) target = $region29
  $region28: #{forward.1} parent=0 // pred_region
    _
  $region29: #{forward.1} parent=0 // pred_fallthru
    _
  %vm27 = vcmask 1040384
  %vm28 = vsmask.f32 256
  %vm29 = vmand %vm27, %vm28
  %v30 = vld [vmem:[#allocation2] sm:$0x1]
  %v31 = vsel %vm29, 0, %v30
  %32 = vst [vmem:[#allocation2] sm:$0x1] %v31
  %vm33 = vsmask.f32 7938
  %vm34 = vmand %vm27, %vm33
  %v35 = vld [vmem:[#allocation2 + $0x8] sm:$0x1]
  %v36 = vsel %vm34, 0, %v35
  %37 = vst [vmem:[#allocation2 + $0x8] sm:$0x1] %v36
  %vm38 = vcmask 1041409
  %vm39 = vsmask.f32 1280
  %vm40 = vmand %vm38, %vm39
  %v41 = vld [vmem:[#allocation2 + $0x8] sm:$0x2]
  %v42 = vsel %vm40, 0, %v41
  %43 = vst [vmem:[#allocation2 + $0x8] sm:$0x2] %v42
  %vm44 = vsmask.f32 7942
  %vm45 = vmand %vm38, %vm44
  %v46 = vld [vmem:[#allocation2 + $0x10] sm:$0x2]
  %v47 = vsel %vm45, 0, %v46
  %48 = vst [vmem:[#allocation2 + $0x10] sm:$0x2] %v47
  %v49 = vld [vmem:[%s0] sm:$0xf]
  %v50 = vld [vmem:[%s0 + $0x4] sm:$0xf]
  %v51 = vld [vmem:[%s0 + $0x8] sm:$0xf]
  %v52 = vld [vmem:[%s0 + $0xc] sm:$0xf]
  %vm53 = vsmask.f32 4368
  %vm54 = vmor %vm28, %vm53
  %v56 = vshrl.u32 %v49, 16
  %v58 = vrot.slane %v56, 7
  %v59 = vshll.u32 %v49, 16
  %v61 = vor.u32 %v58, %v59
  %v62 = vrot.slane %v58, 4
  %v64 = vshrl.u32 %v50, 16
  %v66 = vrot.slane %v64, 7
  %v67 = vshll.u32 %v50, 16
  %v69 = vor.u32 %v66, %v67
  %v70 = vsel %vm54, %v62, %v69
  %v71 = vrot.slane %v66, 4
  %vm75 = vcmask 1043456
  %vm76 = vmand %vm75, %vm33
  %v77 = vld [vmem:[#allocation2] sm:$0xf]
  %v78 = vsel %vm76, %v61, %v77
  %79 = vst [vmem:[#allocation2] sm:$0xf] %v78
  %80 = vst [vmem:[#allocation2 + $0x4] sm:$0xf] %v70
  %v81 = vld [vmem:[#allocation2 + $0x8] sm:$0x1]
  %v82 = vsel %vm29, %v71, %v81
  %83 = vst [vmem:[#allocation2 + $0x8] sm:$0x1] %v82
  %vm84 = vsmask.f32 5392
  %vm85 = vmor %vm39, %vm84
  %v87 = vshrl.u32 %v51, 16
  %v89 = vrot.slane %v87, 6
  %v90 = vshll.u32 %v51, 16
  %v92 = vrot.slane %v90, 7
  %v93 = vor.u32 %v89, %v92
  %v94 = vrot.slane %v93, 4
  %v96 = vshrl.u32 %v52, 16
  %v98 = vrot.slane %v96, 6
  %v99 = vshll.u32 %v52, 16
  %v101 = vrot.slane %v99, 7
  %v102 = vor.u32 %v98, %v101
  %v103 = vsel %vm85, %v94, %v102
  %v104 = vrot.slane %v102, 4
  %vm108 = vcmask 1043457
  %vm109 = vmand %vm108, %vm44
  %v110 = vld [vmem:[#allocation2 + $0x8] sm:$0xe]
  %v111 = vsel %vm109, %v93, %v110
  %112 = vst [vmem:[#allocation2 + $0x8] sm:$0xe] %v111
  %113 = vst [vmem:[#allocation2 + $0xc] sm:$0xf] %v103
  %vm114 = vcmask 1041408
  %vm115 = vmand %vm114, %vm39
  %v116 = vld [vmem:[#allocation2 + $0x10] sm:$0x3]
  %v117 = vsel %vm115, %v104, %v116
  %118 = vst [vmem:[#allocation2 + $0x10] sm:$0x3] %v117
  %v119 = vld [vmem:[#allocation2] sm:$0xf]
  %v120 = vld [vmem:[#allocation2 + $0x4] sm:$0xf]
  %v121 = vld [vmem:[#allocation2 + $0x8] sm:$0xf]
  %v122 = vld [vmem:[#allocation2 + $0xc] sm:$0xf]
  %v123 = vld [vmem:[#allocation2 + $0x10] sm:$0x1]
  %v124 = vld [vmem:[%s1] sm:$0xf]
  %v125 = vld [vmem:[%s1 + $0x4] sm:$0xf]
  %v126 = vld [vmem:[%s1 + $0x8] sm:$0xf]
  %v127 = vld [vmem:[%s1 + $0xc] sm:$0xf]
  %v128 = vld [vmem:[%s1 + $0x10] sm:$0xf]
  %v129 = vld [vmem:[%s1 + $0x14] sm:$0xf]
  %v130 = vld [vmem:[%s1 + $0x18] sm:$0xf]
  %v131 = vld [vmem:[%s1 + $0x1c] sm:$0xf]
  %v132 = vld [vmem:[%s1 + $0x20] sm:$0xf]
  %v133 = vld [vmem:[%s1 + $0x24] sm:$0xf]
  %v134 = vld [vmem:[%s1 + $0x28] sm:$0xf]
  %v135 = vld [vmem:[%s1 + $0x2c] sm:$0xf]
  %v136 = vld [vmem:[%s1 + $0x30] sm:$0xf]
  %v137 = vld [vmem:[%s1 + $0x34] sm:$0xf]
  %v138 = vld [vmem:[%s1 + $0x38] sm:$0xf]
  %v139 = vld [vmem:[%s1 + $0x3c] sm:$0xf]
  %v140 = vld [vmem:[#allocation2 + $0x10] sm:$0x3]
  %s141 = scalar_lea.vmem %s1, 64
  %v142 = vld [vmem:[%s141] sm:$0xf]
  %v143 = vld [vmem:[%s141 + $0x4] sm:$0xf]
  %v144 = vld [vmem:[%s141 + $0x8] sm:$0xf]
  %v145 = vld [vmem:[%s141 + $0xc] sm:$0xf]
  %v146 = vld [vmem:[%s141 + $0x10] sm:$0xf]
  %v147 = vld [vmem:[%s141 + $0x14] sm:$0xf]
  %v148 = vld [vmem:[%s141 + $0x18] sm:$0xf]
  %v149 = vld [vmem:[%s141 + $0x1c] sm:$0xf]
  %v150 = vld [vmem:[%s141 + $0x20] sm:$0xf]
  %v151 = vld [vmem:[%s141 + $0x24] sm:$0xf]
  %v152 = vld [vmem:[%s141 + $0x28] sm:$0xf]
  %v153 = vld [vmem:[%s141 + $0x2c] sm:$0xf]
  %v154 = vld [vmem:[%s141 + $0x30] sm:$0xf]
  %v155 = vld [vmem:[%s141 + $0x34] sm:$0xf]
  %v156 = vld [vmem:[%s141 + $0x38] sm:$0xf]
  %v157 = vld [vmem:[%s141 + $0x3c] sm:$0xf]
  %v163 = vunpack.c.l.b16 %v119
  %v164 = vunpack.c.l.b16 %v120
  %v165 = vunpack.c.l.b16 %v121
  %v166 = vunpack.c.l.b16 %v122
  %v167 = vunpack.c.l.b16 %v140
  %v168 = vpack.c.b16 %v164, %v163
  %v169 = vpack.c.b16 %v166, %v165
  %v170 = vpack.c.b16 %v167, %v167
  %vm171 = vsmask.f32 7424
  %v173 = vshrl.u32 %v168, 16
  %v175 = vshll.u32 %v168, 16
  %v177 = vrot.slane %v175, 1
  %v178 = vor.u32 %v173, %v177
  %v180 = vshll.u32 %v169, 16
  %v182 = vrot.slane %v180, 1
  %v183 = vsel %vm171, %v178, %v182
  %v184 = vshrl.u32 %v169, 16
  %v186 = vor.u32 %v184, %v182
  %v188 = vshll.u32 %v170, 16
  %v190 = vrot.slane %v188, 1
  %v191 = vsel %vm171, %v186, %v190
  %v192 = vshrl.u32 %v170, 16
  %v194 = vor.u32 %v192, %v190
  %v214 = vunpack.c.l.b16 %v142
  %v215 = vunpack.c.l.b16 %v143
  %v216 = vunpack.c.l.b16 %v144
  %v217 = vunpack.c.l.b16 %v145
  %v218 = vunpack.c.l.b16 %v146
  %v219 = vunpack.c.l.b16 %v147
  %v220 = vunpack.c.l.b16 %v148
  %v221 = vunpack.c.l.b16 %v149
  %v222 = vunpack.c.l.b16 %v150
  %v223 = vunpack.c.l.b16 %v151
  %v224 = vunpack.c.l.b16 %v152
  %v225 = vunpack.c.l.b16 %v153
  %v226 = vunpack.c.l.b16 %v154
  %v227 = vunpack.c.l.b16 %v155
  %v228 = vunpack.c.l.b16 %v156
  %v229 = vunpack.c.l.b16 %v157
  %v230 = vpack.c.b16 %v215, %v214
  %v231 = vpack.c.b16 %v217, %v216
  %v232 = vpack.c.b16 %v219, %v218
  %v233 = vpack.c.b16 %v221, %v220
  %v234 = vpack.c.b16 %v223, %v222
  %v235 = vpack.c.b16 %v225, %v224
  %v236 = vpack.c.b16 %v227, %v226
  %v237 = vpack.c.b16 %v229, %v228
  %246 = vmatprep.subr.bf16.mxu0 0
  %247 = vmatpush1.bf16.msra.mxu0 %v237
  %248 = vmatprep.subr.bf16.mxu0 0
  %249 = vmatpush1.bf16.msra.mxu0 %v236
  %250 = vmatprep.subr.bf16.mxu0 0
  %251 = vmatpush1.bf16.msra.mxu0 %v235
  %252 = vmatprep.subr.bf16.mxu0 0
  %253 = vmatpush1.bf16.msra.mxu0 %v234
  %254 = vmatprep.subr.bf16.mxu0 0
  %255 = vmatpush1.bf16.msra.mxu0 %v233
  %256 = vmatprep.subr.bf16.mxu0 0
  %257 = vmatpush1.bf16.msra.mxu0 %v232
  %258 = vmatprep.subr.bf16.mxu0 0
  %259 = vmatpush1.bf16.msra.mxu0 %v231
  %260 = vmatprep.subr.bf16.mxu0 0
  %261 = vmatpush1.bf16.msra.mxu0 %v230
  %262 = vmatprep.subr.bf16.mxu0 0
  %263 = vmatpush2.bf16.msra.mxu0 0
  %264 = vmatprep.subr.bf16.mxu0 0
  %265 = vmatpush2.bf16.msra.mxu0 0
  %266 = vmatprep.subr.bf16.mxu0 0
  %267 = vmatpush2.bf16.msra.mxu0 0
  %268 = vmatprep.subr.bf16.mxu0 0
  %269 = vmatpush2.bf16.msra.mxu0 0
  %270 = vmatprep.subr.bf16.mxu0 0
  %271 = vmatpush2.bf16.msra.mxu0 0
  %272 = vmatprep.subr.bf16.mxu0 0
  %273 = vmatpush2.bf16.msra.mxu0 0
  %274 = vmatprep.subr.bf16.mxu0 0
  %275 = vmatpush2.bf16.msra.mxu0 0
  %276 = vmatprep.subr.bf16.mxu0 0
  %277 = vmatpush2.bf16.msra.mxu0 0
  %278 = vmatprep.mubr.bf16.mxu0 0
  %279 = vmatmul.mubr.bf16.gmra.mxu0 %v183
  %v280 = vpop.f32.mrf.mxu0
  %v281 = vadd.f32 0.0, %v280
  %v282 = vpop.f32.mrf.mxu0
  %v283 = vpop.f32.mrf.mxu0
  %v284 = vadd.f32 0.0, %v283
  %v285 = vpop.f32.mrf.mxu0
  %286 = vmatprep.mubr.bf16.mxu0 0
  %287 = vmatmul.mubr.bf16.gmra.mxu0 %v191
  %v288 = vpop.f32.mrf.mxu0
  %v289 = vadd.f32 0.0, %v288
  %v290 = vpop.f32.mrf.mxu0
  %v291 = vpop.f32.mrf.mxu0
  %v292 = vadd.f32 0.0, %v291
  %v293 = vpop.f32.mrf.mxu0
  %294 = vmatprep.mubr.bf16.mxu0 0
  %295 = vmatmul.mubr.bf16.gmra.mxu0 %v194
  %v296 = vpop.f32.mrf.mxu0
  %v297 = vadd.f32 0.0, %v296
  %v298 = vpop.f32.mrf.mxu0
  %v299 = vpop.f32.mrf.mxu0
  %v300 = vpop.f32.mrf.mxu0
  %301 = vdwg.mxu0
  %v303 = vunpack.c.l.b16 %v123
  %v304 = vpack.c.b16 %v303, %v303
  %v324 = vunpack.c.l.b16 %v124
  %v325 = vunpack.c.l.b16 %v125
  %v326 = vunpack.c.l.b16 %v126
  %v327 = vunpack.c.l.b16 %v127
  %v328 = vunpack.c.l.b16 %v128
  %v329 = vunpack.c.l.b16 %v129
  %v330 = vunpack.c.l.b16 %v130
  %v331 = vunpack.c.l.b16 %v131
  %v332 = vunpack.c.l.b16 %v132
  %v333 = vunpack.c.l.b16 %v133
  %v334 = vunpack.c.l.b16 %v134
  %v335 = vunpack.c.l.b16 %v135
  %v336 = vunpack.c.l.b16 %v136
  %v337 = vunpack.c.l.b16 %v137
  %v338 = vunpack.c.l.b16 %v138
  %v339 = vunpack.c.l.b16 %v139
  %v340 = vpack.c.b16 %v325, %v324
  %v341 = vpack.c.b16 %v327, %v326
  %v342 = vpack.c.b16 %v329, %v328
  %v343 = vpack.c.b16 %v331, %v330
  %v344 = vpack.c.b16 %v333, %v332
  %v345 = vpack.c.b16 %v335, %v334
  %v346 = vpack.c.b16 %v337, %v336
  %v347 = vpack.c.b16 %v339, %v338
  %356 = vmatprep.subr.bf16.mxu0 0
  %357 = vmatpush1.bf16.msra.mxu0 %v347
  %358 = vmatprep.subr.bf16.mxu0 0
  %359 = vmatpush1.bf16.msra.mxu0 %v346
  %360 = vmatprep.subr.bf16.mxu0 0
  %361 = vmatpush1.bf16.msra.mxu0 %v345
  %362 = vmatprep.subr.bf16.mxu0 0
  %363 = vmatpush1.bf16.msra.mxu0 %v344
  %364 = vmatprep.subr.bf16.mxu0 0
  %365 = vmatpush1.bf16.msra.mxu0 %v343
  %366 = vmatprep.subr.bf16.mxu0 0
  %367 = vmatpush1.bf16.msra.mxu0 %v342
  %368 = vmatprep.subr.bf16.mxu0 0
  %369 = vmatpush1.bf16.msra.mxu0 %v341
  %370 = vmatprep.subr.bf16.mxu0 0
  %371 = vmatpush1.bf16.msra.mxu0 %v340
  %372 = vmatprep.subr.bf16.mxu0 0
  %373 = vmatpush2.bf16.msra.mxu0 0
  %374 = vmatprep.subr.bf16.mxu0 0
  %375 = vmatpush2.bf16.msra.mxu0 0
  %376 = vmatprep.subr.bf16.mxu0 0
  %377 = vmatpush2.bf16.msra.mxu0 0
  %378 = vmatprep.subr.bf16.mxu0 0
  %379 = vmatpush2.bf16.msra.mxu0 0
  %380 = vmatprep.subr.bf16.mxu0 0
  %381 = vmatpush2.bf16.msra.mxu0 0
  %382 = vmatprep.subr.bf16.mxu0 0
  %383 = vmatpush2.bf16.msra.mxu0 0
  %384 = vmatprep.subr.bf16.mxu0 0
  %385 = vmatpush2.bf16.msra.mxu0 0
  %386 = vmatprep.subr.bf16.mxu0 0
  %387 = vmatpush2.bf16.msra.mxu0 0
  %388 = vmatprep.mubr.bf16.mxu0 0
  %389 = vmatmul.mubr.bf16.gmra.mxu0 %v168
  %v390 = vpop.f32.mrf.mxu0
  %v391 = vadd.f32 %v281, %v390
  %v392 = vpop.f32.mrf.mxu0
  %v393 = vpop.f32.mrf.mxu0
  %v394 = vadd.f32 %v284, %v393
  %v395 = vpop.f32.mrf.mxu0
  %396 = vmatprep.mubr.bf16.mxu0 0
  %397 = vmatmul.mubr.bf16.gmra.mxu0 %v169
  %v398 = vpop.f32.mrf.mxu0
  %v399 = vadd.f32 %v289, %v398
  %v400 = vpop.f32.mrf.mxu0
  %v401 = vpop.f32.mrf.mxu0
  %v402 = vadd.f32 %v292, %v401
  %v403 = vpop.f32.mrf.mxu0
  %404 = vmatprep.mubr.bf16.mxu0 0
  %405 = vmatmul.mubr.bf16.gmra.mxu0 %v304
  %v406 = vpop.f32.mrf.mxu0
  %v407 = vadd.f32 %v297, %v406
  %v408 = vpop.f32.mrf.mxu0
  %v409 = vpop.f32.mrf.mxu0
  %v410 = vpop.f32.mrf.mxu0
  %411 = vdwg.mxu0
  %v412 = vld [vmem:[#allocation2] sm:$0xe]
  %s413 = scalar_lea.vmem %s1, 128
  %v414 = vld [vmem:[%s413] sm:$0xf]
  %v415 = vld [vmem:[%s413 + $0x4] sm:$0xf]
  %v416 = vld [vmem:[%s413 + $0x8] sm:$0xf]
  %v417 = vld [vmem:[%s413 + $0xc] sm:$0xf]
  %v418 = vld [vmem:[%s413 + $0x10] sm:$0xf]
  %v419 = vld [vmem:[%s413 + $0x14] sm:$0xf]
  %v420 = vld [vmem:[%s413 + $0x18] sm:$0xf]
  %v421 = vld [vmem:[%s413 + $0x1c] sm:$0xf]
  %v422 = vld [vmem:[%s413 + $0x20] sm:$0xf]
  %v423 = vld [vmem:[%s413 + $0x24] sm:$0xf]
  %v424 = vld [vmem:[%s413 + $0x28] sm:$0xf]
  %v425 = vld [vmem:[%s413 + $0x2c] sm:$0xf]
  %v426 = vld [vmem:[%s413 + $0x30] sm:$0xf]
  %v427 = vld [vmem:[%s413 + $0x34] sm:$0xf]
  %v428 = vld [vmem:[%s413 + $0x38] sm:$0xf]
  %v429 = vld [vmem:[%s413 + $0x3c] sm:$0xf]
  %v431 = vunpack.c.l.b16 %v412
  %v432 = vpack.c.b16 %v164, %v431
  %vm433 = vcmask 1046528
  %v434 = vrot.slane %v432, 1
  %v435 = vrot.slane %v169, 1
  %v436 = vsel %vm433, %v434, %v435
  %v437 = vrot.slane %v170, 1
  %v438 = vsel %vm433, %v435, %v437
  %v458 = vunpack.c.l.b16 %v414
  %v459 = vunpack.c.l.b16 %v415
  %v460 = vunpack.c.l.b16 %v416
  %v461 = vunpack.c.l.b16 %v417
  %v462 = vunpack.c.l.b16 %v418
  %v463 = vunpack.c.l.b16 %v419
  %v464 = vunpack.c.l.b16 %v420
  %v465 = vunpack.c.l.b16 %v421
  %v466 = vunpack.c.l.b16 %v422
  %v467 = vunpack.c.l.b16 %v423
  %v468 = vunpack.c.l.b16 %v424
  %v469 = vunpack.c.l.b16 %v425
  %v470 = vunpack.c.l.b16 %v426
  %v471 = vunpack.c.l.b16 %v427
  %v472 = vunpack.c.l.b16 %v428
  %v473 = vunpack.c.l.b16 %v429
  %v474 = vpack.c.b16 %v459, %v458
  %v475 = vpack.c.b16 %v461, %v460
  %v476 = vpack.c.b16 %v463, %v462
  %v477 = vpack.c.b16 %v465, %v464
  %v478 = vpack.c.b16 %v467, %v466
  %v479 = vpack.c.b16 %v469, %v468
  %v480 = vpack.c.b16 %v471, %v470
  %v481 = vpack.c.b16 %v473, %v472
  %490 = vmatprep.subr.bf16.mxu0 0
  %491 = vmatpush1.bf16.msra.mxu0 %v481
  %492 = vmatprep.subr.bf16.mxu0 0
  %493 = vmatpush1.bf16.msra.mxu0 %v480
  %494 = vmatprep.subr.bf16.mxu0 0
  %495 = vmatpush1.bf16.msra.mxu0 %v479
  %496 = vmatprep.subr.bf16.mxu0 0
  %497 = vmatpush1.bf16.msra.mxu0 %v478
  %498 = vmatprep.subr.bf16.mxu0 0
  %499 = vmatpush1.bf16.msra.mxu0 %v477
  %500 = vmatprep.subr.bf16.mxu0 0
  %501 = vmatpush1.bf16.msra.mxu0 %v476
  %502 = vmatprep.subr.bf16.mxu0 0
  %503 = vmatpush1.bf16.msra.mxu0 %v475
  %504 = vmatprep.subr.bf16.mxu0 0
  %505 = vmatpush1.bf16.msra.mxu0 %v474
  %506 = vmatprep.subr.bf16.mxu0 0
  %507 = vmatpush2.bf16.msra.mxu0 0
  %508 = vmatprep.subr.bf16.mxu0 0
  %509 = vmatpush2.bf16.msra.mxu0 0
  %510 = vmatprep.subr.bf16.mxu0 0
  %511 = vmatpush2.bf16.msra.mxu0 0
  %512 = vmatprep.subr.bf16.mxu0 0
  %513 = vmatpush2.bf16.msra.mxu0 0
  %514 = vmatprep.subr.bf16.mxu0 0
  %515 = vmatpush2.bf16.msra.mxu0 0
  %516 = vmatprep.subr.bf16.mxu0 0
  %517 = vmatpush2.bf16.msra.mxu0 0
  %518 = vmatprep.subr.bf16.mxu0 0
  %519 = vmatpush2.bf16.msra.mxu0 0
  %520 = vmatprep.subr.bf16.mxu0 0
  %521 = vmatpush2.bf16.msra.mxu0 0
  %522 = vmatprep.mubr.bf16.mxu0 0
  %523 = vmatmul.mubr.bf16.gmra.mxu0 %v436
  %v524 = vpop.f32.mrf.mxu0
  %v525 = vadd.f32 0.0, %v524
  %v526 = vpop.f32.mrf.mxu0
  %v527 = vpop.f32.mrf.mxu0
  %v528 = vadd.f32 0.0, %v527
  %v529 = vpop.f32.mrf.mxu0
  %530 = vmatprep.mubr.bf16.mxu0 0
  %531 = vmatmul.mubr.bf16.gmra.mxu0 %v438
  %v532 = vpop.f32.mrf.mxu0
  %v533 = vadd.f32 0.0, %v532
  %v534 = vpop.f32.mrf.mxu0
  %v535 = vpop.f32.mrf.mxu0
  %v536 = vadd.f32 0.0, %v535
  %v537 = vpop.f32.mrf.mxu0
  %538 = vmatprep.mubr.bf16.mxu0 0
  %539 = vmatmul.mubr.bf16.gmra.mxu0 %v437
  %v540 = vpop.f32.mrf.mxu0
  %v541 = vadd.f32 0.0, %v540
  %v542 = vpop.f32.mrf.mxu0
  %v543 = vpop.f32.mrf.mxu0
  %v544 = vpop.f32.mrf.mxu0
  %545 = vdwg.mxu0
  %v546 = vadd.f32 %v391, %v525
  %v547 = vadd.f32 %v394, %v528
  %v548 = vadd.f32 %v399, %v533
  %v549 = vadd.f32 %v402, %v536
  %v550 = vadd.f32 %v407, %v541
  %v551 = vld [vmem:[%s2] sm:$0x1]
  %v553 = vlaneseq
  %v554 = vshrl.u32 %v553, 7
  %v555 = vsub.s32 0, %v554
  %v556 = vrot.slane %v551, %v555
  %v558 = vmul.f32 %v546, %v556
  %v559 = vmul.f32 %v547, %v556
  %v560 = vmul.f32 %v548, %v556
  %v561 = vmul.f32 %v549, %v556
  %v562 = vmul.f32 %v550, %v556
  %v563 = vld [vmem:[%s3] sm:$0x1]
  %v565 = vlaneseq
  %v566 = vshrl.u32 %v565, 7
  %v567 = vsub.s32 0, %v566
  %v568 = vrot.slane %v563, %v567
  %v570 = vadd.f32 %v558, %v568
  %v571 = vadd.f32 %v559, %v568
  %v572 = vadd.f32 %v560, %v568
  %v573 = vadd.f32 %v561, %v568
  %v574 = vadd.f32 %v562, %v568
  %v575 = vmax.f32 %v570, 0.0
  %v576 = vmax.f32 %v571, 0.0
  %v577 = vmax.f32 %v572, 0.0
  %v578 = vmax.f32 %v573, 0.0
  %v579 = vmax.f32 %v574, 0.0
  %v580 = vpack.c.bf16 %v576, %v575
  %v581 = vpack.c.bf16 %v578, %v577
  %v582 = vpack.c.bf16 %v579, %v579
  %v584 = vunpack.c.l.b16 %v580
  %v585 = vunpack.c.h.b16 %v580
  %v586 = vpack.c.b16 %v584, %v584
  %v587 = vpack.c.b16 %v585, %v585
  %v589 = vshrl.u32 %v586, 16
  %v591 = vrot.slane %v589, 7
  %v592 = vshll.u32 %v586, 16
  %v594 = vor.u32 %v591, %v592
  %v595 = vrot.slane %v591, 4
  %v597 = vshrl.u32 %v587, 16
  %v599 = vrot.slane %v597, 7
  %v600 = vshll.u32 %v587, 16
  %v602 = vor.u32 %v599, %v600
  %v603 = vsel %vm54, %v595, %v602
  %v604 = vrot.slane %v599, 4
  %v608 = vld [vmem:[#allocation2] sm:$0xf]
  %v609 = vsel %vm76, %v594, %v608
  %610 = vst [vmem:[#allocation2] sm:$0xf] %v609
  %611 = vst [vmem:[#allocation2 + $0x4] sm:$0xf] %v603
  %v612 = vld [vmem:[#allocation2 + $0x8] sm:$0x1]
  %v613 = vsel %vm29, %v604, %v612
  %614 = vst [vmem:[#allocation2 + $0x8] sm:$0x1] %v613
  %v617 = vunpack.c.l.b16 %v581
  %v618 = vunpack.c.h.b16 %v581
  %v619 = vunpack.c.l.b16 %v582
  %v620 = vpack.c.b16 %v617, %v617
  %v621 = vpack.c.b16 %v618, %v618
  %v622 = vpack.c.b16 %v619, %v619
  %v624 = vshrl.u32 %v620, 16
  %v626 = vrot.slane %v624, 7
  %v627 = vshll.u32 %v620, 16
  %v629 = vor.u32 %v626, %v627
  %v630 = vrot.slane %v626, 4
  %v632 = vshrl.u32 %v621, 16
  %v634 = vrot.slane %v632, 7
  %v635 = vshll.u32 %v621, 16
  %v637 = vor.u32 %v634, %v635
  %v638 = vsel %vm54, %v630, %v637
  %v639 = vrot.slane %v634, 4
  %v641 = vshrl.u32 %v622, 16
  %v643 = vrot.slane %v641, 7
  %v644 = vshll.u32 %v622, 16
  %v646 = vor.u32 %v643, %v644
  %v647 = vsel %vm54, %v639, %v646
  %v651 = vld [vmem:[#allocation2 + $0x8] sm:$0xe]
  %v652 = vsel %vm109, %v629, %v651
  %653 = vst [vmem:[#allocation2 + $0x8] sm:$0xe] %v652
  %654 = vst [vmem:[#allocation2 + $0xc] sm:$0xf] %v638
  %v655 = vld [vmem:[#allocation2 + $0x10] sm:$0x3]
  %v656 = vsel %vm115, %v647, %v655
  %657 = vst [vmem:[#allocation2 + $0x10] sm:$0x3] %v656
  %v658 = vld [vmem:[#allocation2] sm:$0xf]
  %v659 = vld [vmem:[#allocation2 + $0x4] sm:$0xf]
  %v660 = vld [vmem:[#allocation2 + $0x8] sm:$0xf]
  %v661 = vld [vmem:[#allocation2 + $0xc] sm:$0xf]
  %v662 = vld [vmem:[#allocation2 + $0x10] sm:$0x1]
  %v663 = vld [vmem:[%s4] sm:$0xf]
  %v664 = vld [vmem:[%s4 + $0x4] sm:$0xf]
  %v665 = vld [vmem:[%s4 + $0x8] sm:$0xf]
  %v666 = vld [vmem:[%s4 + $0xc] sm:$0xf]
  %v667 = vld [vmem:[%s4 + $0x10] sm:$0xf]
  %v668 = vld [vmem:[%s4 + $0x14] sm:$0xf]
  %v669 = vld [vmem:[%s4 + $0x18] sm:$0xf]
  %v670 = vld [vmem:[%s4 + $0x1c] sm:$0xf]
  %v671 = vld [vmem:[%s4 + $0x20] sm:$0xf]
  %v672 = vld [vmem:[%s4 + $0x24] sm:$0xf]
  %v673 = vld [vmem:[%s4 + $0x28] sm:$0xf]
  %v674 = vld [vmem:[%s4 + $0x2c] sm:$0xf]
  %v675 = vld [vmem:[%s4 + $0x30] sm:$0xf]
  %v676 = vld [vmem:[%s4 + $0x34] sm:$0xf]
  %v677 = vld [vmem:[%s4 + $0x38] sm:$0xf]
  %v678 = vld [vmem:[%s4 + $0x3c] sm:$0xf]
  %v679 = vld [vmem:[#allocation2 + $0x10] sm:$0x3]
  %s680 = scalar_lea.vmem %s4, 64
  %v681 = vld [vmem:[%s680] sm:$0xf]
  %v682 = vld [vmem:[%s680 + $0x4] sm:$0xf]
  %v683 = vld [vmem:[%s680 + $0x8] sm:$0xf]
  %v684 = vld [vmem:[%s680 + $0xc] sm:$0xf]
  %v685 = vld [vmem:[%s680 + $0x10] sm:$0xf]
  %v686 = vld [vmem:[%s680 + $0x14] sm:$0xf]
  %v687 = vld [vmem:[%s680 + $0x18] sm:$0xf]
  %v688 = vld [vmem:[%s680 + $0x1c] sm:$0xf]
  %v689 = vld [vmem:[%s680 + $0x20] sm:$0xf]
  %v690 = vld [vmem:[%s680 + $0x24] sm:$0xf]
  %v691 = vld [vmem:[%s680 + $0x28] sm:$0xf]
  %v692 = vld [vmem:[%s680 + $0x2c] sm:$0xf]
  %v693 = vld [vmem:[%s680 + $0x30] sm:$0xf]
  %v694 = vld [vmem:[%s680 + $0x34] sm:$0xf]
  %v695 = vld [vmem:[%s680 + $0x38] sm:$0xf]
  %v696 = vld [vmem:[%s680 + $0x3c] sm:$0xf]
  %v702 = vunpack.c.l.b16 %v658
  %v703 = vunpack.c.l.b16 %v659
  %v704 = vunpack.c.l.b16 %v660
  %v705 = vunpack.c.l.b16 %v661
  %v706 = vunpack.c.l.b16 %v679
  %v707 = vpack.c.b16 %v703, %v702
  %v708 = vpack.c.b16 %v705, %v704
  %v709 = vpack.c.b16 %v706, %v706
  %v711 = vshrl.u32 %v707, 16
  %v713 = vshll.u32 %v707, 16
  %v715 = vrot.slane %v713, 1
  %v716 = vor.u32 %v711, %v715
  %v718 = vshll.u32 %v708, 16
  %v720 = vrot.slane %v718, 1
  %v721 = vsel %vm171, %v716, %v720
  %v722 = vshrl.u32 %v708, 16
  %v724 = vor.u32 %v722, %v720
  %v726 = vshll.u32 %v709, 16
  %v728 = vrot.slane %v726, 1
  %v729 = vsel %vm171, %v724, %v728
  %v730 = vshrl.u32 %v709, 16
  %v732 = vor.u32 %v730, %v728
  %v752 = vunpack.c.l.b16 %v681
  %v753 = vunpack.c.l.b16 %v682
  %v754 = vunpack.c.l.b16 %v683
  %v755 = vunpack.c.l.b16 %v684
  %v756 = vunpack.c.l.b16 %v685
  %v757 = vunpack.c.l.b16 %v686
  %v758 = vunpack.c.l.b16 %v687
  %v759 = vunpack.c.l.b16 %v688
  %v760 = vunpack.c.l.b16 %v689
  %v761 = vunpack.c.l.b16 %v690
  %v762 = vunpack.c.l.b16 %v691
  %v763 = vunpack.c.l.b16 %v692
  %v764 = vunpack.c.l.b16 %v693
  %v765 = vunpack.c.l.b16 %v694
  %v766 = vunpack.c.l.b16 %v695
  %v767 = vunpack.c.l.b16 %v696
  %v768 = vpack.c.b16 %v753, %v752
  %v769 = vpack.c.b16 %v755, %v754
  %v770 = vpack.c.b16 %v757, %v756
  %v771 = vpack.c.b16 %v759, %v758
  %v772 = vpack.c.b16 %v761, %v760
  %v773 = vpack.c.b16 %v763, %v762
  %v774 = vpack.c.b16 %v765, %v764
  %v775 = vpack.c.b16 %v767, %v766
  %784 = vmatprep.subr.bf16.mxu0 0
  %785 = vmatpush1.bf16.msra.mxu0 %v775
  %786 = vmatprep.subr.bf16.mxu0 0
  %787 = vmatpush1.bf16.msra.mxu0 %v774
  %788 = vmatprep.subr.bf16.mxu0 0
  %789 = vmatpush1.bf16.msra.mxu0 %v773
  %790 = vmatprep.subr.bf16.mxu0 0
  %791 = vmatpush1.bf16.msra.mxu0 %v772
  %792 = vmatprep.subr.bf16.mxu0 0
  %793 = vmatpush1.bf16.msra.mxu0 %v771
  %794 = vmatprep.subr.bf16.mxu0 0
  %795 = vmatpush1.bf16.msra.mxu0 %v770
  %796 = vmatprep.subr.bf16.mxu0 0
  %797 = vmatpush1.bf16.msra.mxu0 %v769
  %798 = vmatprep.subr.bf16.mxu0 0
  %799 = vmatpush1.bf16.msra.mxu0 %v768
  %800 = vmatprep.subr.bf16.mxu0 0
  %801 = vmatpush2.bf16.msra.mxu0 0
  %802 = vmatprep.subr.bf16.mxu0 0
  %803 = vmatpush2.bf16.msra.mxu0 0
  %804 = vmatprep.subr.bf16.mxu0 0
  %805 = vmatpush2.bf16.msra.mxu0 0
  %806 = vmatprep.subr.bf16.mxu0 0
  %807 = vmatpush2.bf16.msra.mxu0 0
  %808 = vmatprep.subr.bf16.mxu0 0
  %809 = vmatpush2.bf16.msra.mxu0 0
  %810 = vmatprep.subr.bf16.mxu0 0
  %811 = vmatpush2.bf16.msra.mxu0 0
  %812 = vmatprep.subr.bf16.mxu0 0
  %813 = vmatpush2.bf16.msra.mxu0 0
  %814 = vmatprep.subr.bf16.mxu0 0
  %815 = vmatpush2.bf16.msra.mxu0 0
  %816 = vmatprep.mubr.bf16.mxu0 0
  %817 = vmatmul.mubr.bf16.gmra.mxu0 %v721
  %v818 = vpop.f32.mrf.mxu0
  %v819 = vadd.f32 0.0, %v818
  %v820 = vpop.f32.mrf.mxu0
  %v821 = vpop.f32.mrf.mxu0
  %v822 = vadd.f32 0.0, %v821
  %v823 = vpop.f32.mrf.mxu0
  %824 = vmatprep.mubr.bf16.mxu0 0
  %825 = vmatmul.mubr.bf16.gmra.mxu0 %v729
  %v826 = vpop.f32.mrf.mxu0
  %v827 = vadd.f32 0.0, %v826
  %v828 = vpop.f32.mrf.mxu0
  %v829 = vpop.f32.mrf.mxu0
  %v830 = vadd.f32 0.0, %v829
  %v831 = vpop.f32.mrf.mxu0
  %832 = vmatprep.mubr.bf16.mxu0 0
  %833 = vmatmul.mubr.bf16.gmra.mxu0 %v732
  %v834 = vpop.f32.mrf.mxu0
  %v835 = vadd.f32 0.0, %v834
  %v836 = vpop.f32.mrf.mxu0
  %v837 = vpop.f32.mrf.mxu0
  %v838 = vpop.f32.mrf.mxu0
  %839 = vdwg.mxu0
  %v841 = vunpack.c.l.b16 %v662
  %v842 = vpack.c.b16 %v841, %v841
  %v862 = vunpack.c.l.b16 %v663
  %v863 = vunpack.c.l.b16 %v664
  %v864 = vunpack.c.l.b16 %v665
  %v865 = vunpack.c.l.b16 %v666
  %v866 = vunpack.c.l.b16 %v667
  %v867 = vunpack.c.l.b16 %v668
  %v868 = vunpack.c.l.b16 %v669
  %v869 = vunpack.c.l.b16 %v670
  %v870 = vunpack.c.l.b16 %v671
  %v871 = vunpack.c.l.b16 %v672
  %v872 = vunpack.c.l.b16 %v673
  %v873 = vunpack.c.l.b16 %v674
  %v874 = vunpack.c.l.b16 %v675
  %v875 = vunpack.c.l.b16 %v676
  %v876 = vunpack.c.l.b16 %v677
  %v877 = vunpack.c.l.b16 %v678
  %v878 = vpack.c.b16 %v863, %v862
  %v879 = vpack.c.b16 %v865, %v864
  %v880 = vpack.c.b16 %v867, %v866
  %v881 = vpack.c.b16 %v869, %v868
  %v882 = vpack.c.b16 %v871, %v870
  %v883 = vpack.c.b16 %v873, %v872
  %v884 = vpack.c.b16 %v875, %v874
  %v885 = vpack.c.b16 %v877, %v876
  %894 = vmatprep.subr.bf16.mxu0 0
  %895 = vmatpush1.bf16.msra.mxu0 %v885
  %896 = vmatprep.subr.bf16.mxu0 0
  %897 = vmatpush1.bf16.msra.mxu0 %v884
  %898 = vmatprep.subr.bf16.mxu0 0
  %899 = vmatpush1.bf16.msra.mxu0 %v883
  %900 = vmatprep.subr.bf16.mxu0 0
  %901 = vmatpush1.bf16.msra.mxu0 %v882
  %902 = vmatprep.subr.bf16.mxu0 0
  %903 = vmatpush1.bf16.msra.mxu0 %v881
  %904 = vmatprep.subr.bf16.mxu0 0
  %905 = vmatpush1.bf16.msra.mxu0 %v880
  %906 = vmatprep.subr.bf16.mxu0 0
  %907 = vmatpush1.bf16.msra.mxu0 %v879
  %908 = vmatprep.subr.bf16.mxu0 0
  %909 = vmatpush1.bf16.msra.mxu0 %v878
  %910 = vmatprep.subr.bf16.mxu0 0
  %911 = vmatpush2.bf16.msra.mxu0 0
  %912 = vmatprep.subr.bf16.mxu0 0
  %913 = vmatpush2.bf16.msra.mxu0 0
  %914 = vmatprep.subr.bf16.mxu0 0
  %915 = vmatpush2.bf16.msra.mxu0 0
  %916 = vmatprep.subr.bf16.mxu0 0
  %917 = vmatpush2.bf16.msra.mxu0 0
  %918 = vmatprep.subr.bf16.mxu0 0
  %919 = vmatpush2.bf16.msra.mxu0 0
  %920 = vmatprep.subr.bf16.mxu0 0
  %921 = vmatpush2.bf16.msra.mxu0 0
  %922 = vmatprep.subr.bf16.mxu0 0
  %923 = vmatpush2.bf16.msra.mxu0 0
  %924 = vmatprep.subr.bf16.mxu0 0
  %925 = vmatpush2.bf16.msra.mxu0 0
  %926 = vmatprep.mubr.bf16.mxu0 0
  %927 = vmatmul.mubr.bf16.gmra.mxu0 %v707
  %v928 = vpop.f32.mrf.mxu0
  %v929 = vadd.f32 %v819, %v928
  %v930 = vpop.f32.mrf.mxu0
  %v931 = vpop.f32.mrf.mxu0
  %v932 = vadd.f32 %v822, %v931
  %v933 = vpop.f32.mrf.mxu0
  %934 = vmatprep.mubr.bf16.mxu0 0
  %935 = vmatmul.mubr.bf16.gmra.mxu0 %v708
  %v936 = vpop.f32.mrf.mxu0
  %v937 = vadd.f32 %v827, %v936
  %v938 = vpop.f32.mrf.mxu0
  %v939 = vpop.f32.mrf.mxu0
  %v940 = vadd.f32 %v830, %v939
  %v941 = vpop.f32.mrf.mxu0
  %942 = vmatprep.mubr.bf16.mxu0 0
  %943 = vmatmul.mubr.bf16.gmra.mxu0 %v842
  %v944 = vpop.f32.mrf.mxu0
  %v945 = vadd.f32 %v835, %v944
  %v946 = vpop.f32.mrf.mxu0
  %v947 = vpop.f32.mrf.mxu0
  %v948 = vpop.f32.mrf.mxu0
  %949 = vdwg.mxu0
  %v950 = vld [vmem:[#allocation2] sm:$0xe]
  %s951 = scalar_lea.vmem %s4, 128
  %v952 = vld [vmem:[%s951] sm:$0xf]
  %v953 = vld [vmem:[%s951 + $0x4] sm:$0xf]
  %v954 = vld [vmem:[%s951 + $0x8] sm:$0xf]
  %v955 = vld [vmem:[%s951 + $0xc] sm:$0xf]
  %v956 = vld [vmem:[%s951 + $0x10] sm:$0xf]
  %v957 = vld [vmem:[%s951 + $0x14] sm:$0xf]
  %v958 = vld [vmem:[%s951 + $0x18] sm:$0xf]
  %v959 = vld [vmem:[%s951 + $0x1c] sm:$0xf]
  %v960 = vld [vmem:[%s951 + $0x20] sm:$0xf]
  %v961 = vld [vmem:[%s951 + $0x24] sm:$0xf]
  %v962 = vld [vmem:[%s951 + $0x28] sm:$0xf]
  %v963 = vld [vmem:[%s951 + $0x2c] sm:$0xf]
  %v964 = vld [vmem:[%s951 + $0x30] sm:$0xf]
  %v965 = vld [vmem:[%s951 + $0x34] sm:$0xf]
  %v966 = vld [vmem:[%s951 + $0x38] sm:$0xf]
  %v967 = vld [vmem:[%s951 + $0x3c] sm:$0xf]
  %v969 = vunpack.c.l.b16 %v950
  %v970 = vpack.c.b16 %v703, %v969
  %v971 = vrot.slane %v970, 1
  %v972 = vrot.slane %v708, 1
  %v973 = vsel %vm433, %v971, %v972
  %v974 = vrot.slane %v709, 1
  %v975 = vsel %vm433, %v972, %v974
  %v995 = vunpack.c.l.b16 %v952
  %v996 = vunpack.c.l.b16 %v953
  %v997 = vunpack.c.l.b16 %v954
  %v998 = vunpack.c.l.b16 %v955
  %v999 = vunpack.c.l.b16 %v956
  %v1000 = vunpack.c.l.b16 %v957
  %v1001 = vunpack.c.l.b16 %v958
  %v1002 = vunpack.c.l.b16 %v959
  %v1003 = vunpack.c.l.b16 %v960
  %v1004 = vunpack.c.l.b16 %v961
  %v1005 = vunpack.c.l.b16 %v962
  %v1006 = vunpack.c.l.b16 %v963
  %v1007 = vunpack.c.l.b16 %v964
  %v1008 = vunpack.c.l.b16 %v965
  %v1009 = vunpack.c.l.b16 %v966
  %v1010 = vunpack.c.l.b16 %v967
  %v1011 = vpack.c.b16 %v996, %v995
  %v1012 = vpack.c.b16 %v998, %v997
  %v1013 = vpack.c.b16 %v1000, %v999
  %v1014 = vpack.c.b16 %v1002, %v1001
  %v1015 = vpack.c.b16 %v1004, %v1003
  %v1016 = vpack.c.b16 %v1006, %v1005
  %v1017 = vpack.c.b16 %v1008, %v1007
  %v1018 = vpack.c.b16 %v1010, %v1009
  %1027 = vmatprep.subr.bf16.mxu0 0
  %1028 = vmatpush1.bf16.msra.mxu0 %v1018
  %1029 = vmatprep.subr.bf16.mxu0 0
  %1030 = vmatpush1.bf16.msra.mxu0 %v1017
  %1031 = vmatprep.subr.bf16.mxu0 0
  %1032 = vmatpush1.bf16.msra.mxu0 %v1016
  %1033 = vmatprep.subr.bf16.mxu0 0
  %1034 = vmatpush1.bf16.msra.mxu0 %v1015
  %1035 = vmatprep.subr.bf16.mxu0 0
  %1036 = vmatpush1.bf16.msra.mxu0 %v1014
  %1037 = vmatprep.subr.bf16.mxu0 0
  %1038 = vmatpush1.bf16.msra.mxu0 %v1013
  %1039 = vmatprep.subr.bf16.mxu0 0
  %1040 = vmatpush1.bf16.msra.mxu0 %v1012
  %1041 = vmatprep.subr.bf16.mxu0 0
  %1042 = vmatpush1.bf16.msra.mxu0 %v1011
  %1043 = vmatprep.subr.bf16.mxu0 0
  %1044 = vmatpush2.bf16.msra.mxu0 0
  %1045 = vmatprep.subr.bf16.mxu0 0
  %1046 = vmatpush2.bf16.msra.mxu0 0
  %1047 = vmatprep.subr.bf16.mxu0 0
  %1048 = vmatpush2.bf16.msra.mxu0 0
  %1049 = vmatprep.subr.bf16.mxu0 0
  %1050 = vmatpush2.bf16.msra.mxu0 0
  %1051 = vmatprep.subr.bf16.mxu0 0
  %1052 = vmatpush2.bf16.msra.mxu0 0
  %1053 = vmatprep.subr.bf16.mxu0 0
  %1054 = vmatpush2.bf16.msra.mxu0 0
  %1055 = vmatprep.subr.bf16.mxu0 0
  %1056 = vmatpush2.bf16.msra.mxu0 0
  %1057 = vmatprep.subr.bf16.mxu0 0
  %1058 = vmatpush2.bf16.msra.mxu0 0
  %1059 = vmatprep.mubr.bf16.mxu0 0
  %1060 = vmatmul.mubr.bf16.gmra.mxu0 %v973
  %v1061 = vpop.f32.mrf.mxu0
  %v1062 = vadd.f32 0.0, %v1061
  %v1063 = vpop.f32.mrf.mxu0
  %v1064 = vpop.f32.mrf.mxu0
  %v1065 = vadd.f32 0.0, %v1064
  %v1066 = vpop.f32.mrf.mxu0
  %1067 = vmatprep.mubr.bf16.mxu0 0
  %1068 = vmatmul.mubr.bf16.gmra.mxu0 %v975
  %v1069 = vpop.f32.mrf.mxu0
  %v1070 = vadd.f32 0.0, %v1069
  %v1071 = vpop.f32.mrf.mxu0
  %v1072 = vpop.f32.mrf.mxu0
  %v1073 = vadd.f32 0.0, %v1072
  %v1074 = vpop.f32.mrf.mxu0
  %1075 = vmatprep.mubr.bf16.mxu0 0
  %1076 = vmatmul.mubr.bf16.gmra.mxu0 %v974
  %v1077 = vpop.f32.mrf.mxu0
  %v1078 = vadd.f32 0.0, %v1077
  %v1079 = vpop.f32.mrf.mxu0
  %v1080 = vpop.f32.mrf.mxu0
  %v1081 = vpop.f32.mrf.mxu0
  %1082 = vdwg.mxu0
  %v1083 = vadd.f32 %v929, %v1062
  %v1084 = vadd.f32 %v932, %v1065
  %v1085 = vadd.f32 %v937, %v1070
  %v1086 = vadd.f32 %v940, %v1073
  %v1087 = vadd.f32 %v945, %v1078
  %v1088 = vld [vmem:[%s5] sm:$0x1]
  %v1090 = vlaneseq
  %v1091 = vshrl.u32 %v1090, 7
  %v1092 = vsub.s32 0, %v1091
  %v1093 = vrot.slane %v1088, %v1092
  %v1095 = vmul.f32 %v1083, %v1093
  %v1096 = vmul.f32 %v1084, %v1093
  %v1097 = vmul.f32 %v1085, %v1093
  %v1098 = vmul.f32 %v1086, %v1093
  %v1099 = vmul.f32 %v1087, %v1093
  %v1100 = vld [vmem:[%s6] sm:$0x1]
  %v1102 = vlaneseq
  %v1103 = vshrl.u32 %v1102, 7
  %v1104 = vsub.s32 0, %v1103
  %v1105 = vrot.slane %v1100, %v1104
  %v1107 = vadd.f32 %v1095, %v1105
  %v1108 = vadd.f32 %v1096, %v1105
  %v1109 = vadd.f32 %v1097, %v1105
  %v1110 = vadd.f32 %v1098, %v1105
  %v1111 = vadd.f32 %v1099, %v1105
  %v1112 = vunpack.c.l.bf16 %v49
  %v1113 = vunpack.c.l.bf16 %v50
  %v1114 = vadd.f32 %v1107, %v1112
  %v1115 = vadd.f32 %v1108, %v1113
  %v1116 = vmax.f32 %v1114, 0.0
  %v1117 = vmax.f32 %v1115, 0.0
  %v1118 = vpack.c.bf16 %v1117, %v1116
  %v1120 = vunpack.c.l.b16 %v1118
  %v1121 = vunpack.c.h.b16 %v1118
  %v1122 = vpack.c.b16 %v1120, %v1120
  %v1123 = vpack.c.b16 %v1121, %v1121
  %1126 = vst [vmem:[%s7] sm:$0xf] %v1122
  %1127 = vst [vmem:[%s7 + $0x4] sm:$0xf] %v1123
  %v1128 = vunpack.c.l.bf16 %v51
  %v1129 = vunpack.c.l.bf16 %v52
  %vm1132 = vcmask 1041408
  %v1133 = vrot.slane %v1128, 6
  %v1134 = vrot.slane %v1129, 6
  %v1135 = vsel %vm1132, %v1133, %v1134
  %v1139 = vadd.f32 %v1109, %v1133
  %v1140 = vadd.f32 %v1110, %v1135
  %v1141 = vadd.f32 %v1111, %v1134
  %v1142 = vmax.f32 %v1139, 0.0
  %v1143 = vmax.f32 %v1140, 0.0
  %v1144 = vmax.f32 %v1141, 0.0
  %v1145 = vpack.c.bf16 %v1143, %v1142
  %v1146 = vpack.c.bf16 %v1144, %v1144
  %v1149 = vunpack.c.l.b16 %v1145
  %v1150 = vunpack.c.h.b16 %v1145
  %v1151 = vunpack.c.l.b16 %v1146
  %v1152 = vpack.c.b16 %v1149, %v1149
  %v1153 = vpack.c.b16 %v1150, %v1150
  %v1154 = vpack.c.b16 %v1151, %v1151
  %vm1155 = vcmask 1042432
  %vm1156 = vcmask 1046532
  %vm1157 = vmor %vm1155, %vm1156
  %v1158 = vrot.slane %v1152, 5
  %v1159 = vrot.slane %v1158, 4
  %v1160 = vrot.slane %v1153, 5
  %v1161 = vsel %vm1157, %v1159, %v1160
  %v1162 = vrot.slane %v1160, 4
  %v1163 = vrot.slane %v1154, 5
  %v1164 = vsel %vm1157, %v1162, %v1163
  %s1167 = scalar_lea.vmem %s7, 8
  %1168 = vst [vmem:[%s1167] sm:$0xf] %v1161
  %1169 = vst [vmem:[%s1167 + $0x4] sm:$0xf] %v1164
  // Predicated region
  $region30: #{forward.1} parent=0 // pred_check
    _
  $region31: #{forward.1} parent=0 // pred_check_branch
    %1171 = sbr.rel (0) target = $region33
  $region32: #{forward.1} parent=0 // pred_region
    _
  $region33: #{forward.1} parent=0 // pred_fallthru
    _
  // Predicated region
  $region34: #{forward.1} parent=0 // pred_check
    _
  $region35: #{forward.1} parent=0 // pred_check_branch
    %1173 = sbr.rel (0) target = $region37
  $region36: #{forward.1} parent=0 // pred_region
    _
  $region37: #{forward.1} parent=0 // pred_fallthru
    _

</llo_original>
